<compile_context>
chip_gen: v6e
topology: v6e:2x2x1
jax: 0.10.0
libtpu: 0.0.40
codegen_flags: <defaults>
</compile_context>

<pallas_src>
import jax
import jax.numpy as jnp
from jax.experimental import pallas as pl
from jax.experimental.pallas import tpu as pltpu


def se_block_kernel(x_ref, w1_ref, w2_ref, o_ref):
    # x_ref / o_ref: (bs, C, L); w1_ref: (C, Cr); w2_ref: (Cr, C)
    # --- squeeze: mean over L (lane-axis reduce, XLU) ---
    pooled = jnp.mean(x_ref[...].astype(jnp.float32), axis=-1)       # (bs, C)
    # --- excitation MLP (tiny; MXU compute is noise at these sizes) ---
    h = jnp.dot(pooled, w1_ref[...].astype(jnp.float32),
                preferred_element_type=jnp.float32)                  # (bs, Cr)
    h = h * jax.nn.sigmoid(h)                                        # SiLU
    s = jnp.dot(h, w2_ref[...].astype(jnp.float32),
                preferred_element_type=jnp.float32)                  # (bs, C)
    s = jax.nn.sigmoid(s)
    # --- scale: re-index x_ref here to keep its vreg live range short ---
    o_ref[...] = x_ref[...] * s[:, :, None].astype(o_ref.dtype)


def _pick_batch_block(B, C, L, itemsize):
    """Largest divisor of B whose tile is <= ~1 MiB while keeping >= 2 grid
    steps (so input/output DMAs pipeline). Falls back to 1-sample tiles."""
    per_sample = C * L * itemsize
    target = 1 << 20  # ~1 MiB tile: amortizes per-step overhead, tiny vs VMEM
    bs = 1
    for cand in range(1, B + 1):
        if B % cand:
            continue
        if cand * per_sample <= target and (B // cand >= 2 or B == 1):
            bs = cand
    return bs


def se_block(x, w1, w2):
    """x: (B, C, L); w1: (C, C//r); w2: (C//r, C). Returns (B, C, L)."""
    B, C, L = x.shape
    Cr = w1.shape[1]
    bs = _pick_batch_block(B, C, L, x.dtype.itemsize)
    grid = (B // bs,)
    return pl.pallas_call(
        se_block_kernel,
        out_shape=jax.ShapeDtypeStruct((B, C, L), x.dtype),
        grid=grid,
        in_specs=[
            # batch-block of x; pipelined across the grid
            pl.BlockSpec((bs, C, L), lambda b: (b, 0, 0)),
            # weights: constant index_map -> DMA'd once, resident in VMEM
            pl.BlockSpec((C, Cr), lambda b: (0, 0)),
            pl.BlockSpec((Cr, C), lambda b: (0, 0)),
        ],
        out_specs=pl.BlockSpec((bs, C, L), lambda b: (b, 0, 0)),
        compiler_params=pltpu.CompilerParams(
            # batch blocks are independent -> megacore sharding on v7x
            dimension_semantics=("parallel",),
        ),
    )(x, w1, w2)


def se_block_ref(x, w1, w2):
    """Pure-JAX reference reproducing the PyTorch forward."""
    pooled = jnp.mean(x, axis=-1)                    # (B, C)
    h = pooled @ w1
    h = h * jax.nn.sigmoid(h)                        # SiLU
    s = jax.nn.sigmoid(h @ w2)                       # (B, C)
    return x * s[:, :, None]


if __name__ == "__main__":
    # Small shapes consistent with the module: batch=2, channels=32, seq len=128.
    B, C, L = 2, 32, 128
    reduction_ratio = 4
    Cr = C // reduction_ratio

    key = jax.random.PRNGKey(0)
    kx, k1, k2 = jax.random.split(key, 3)

    x = jax.random.normal(kx, (B, C, L), dtype=jnp.float32)
    # nn.Linear(C, C//r, bias=False) weight is (C//r, C); y = x @ W.T.
    # We store the already-transposed matrices so the kernel does plain x @ W.
    w1 = jax.random.normal(k1, (C, Cr), dtype=jnp.float32) * 0.1
    w2 = jax.random.normal(k2, (Cr, C), dtype=jnp.float32) * 0.1

    out = se_block(x, w1, w2)
    out = jax.block_until_ready(out)

    ref = se_block_ref(x, w1, w2)
    assert out.shape == (B, C, L)
    assert jnp.allclose(out, ref, atol=1e-5, rtol=1e-5), "mismatch vs reference"

    print("KERNEL_OK")
</pallas_src>

<mosaic_0001>
module attributes {stable_mosaic.version = 11 : i64} {
  func.func @se_block_kernel(%arg0: i32, %arg1: memref<1x32x128xf32, #tpu.memory_space<vmem>>, %arg2: memref<32x8xf32, #tpu.memory_space<vmem>>, %arg3: memref<8x32xf32, #tpu.memory_space<vmem>>, %arg4: memref<1x32x128xf32, #tpu.memory_space<vmem>>) attributes {dimension_semantics = [#tpu.dimension_semantics<parallel>], iteration_bounds = array<i64: 2>, scalar_prefetch = 0 : i64, scratch_operands = 0 : i64, tpu.core_type = #tpu.core_type<tc>, window_params = [{transform_indices = @transform_0, window_bounds = array<i64: 1, 32, 128>}, {pipeline_mode = #tpu.pipeline_mode<synchronous>, transform_indices = @transform_1, window_bounds = array<i64: 32, 8>}, {pipeline_mode = #tpu.pipeline_mode<synchronous>, transform_indices = @transform_2, window_bounds = array<i64: 8, 32>}, {transform_indices = @transform_3, window_bounds = array<i64: 1, 32, 128>}]} {
    %c0 = arith.constant 0 : index
    %c0_0 = arith.constant 0 : index
    %c0_1 = arith.constant 0 : index
    %0 = vector.load %arg1[%c0, %c0_0, %c0_1] : memref<1x32x128xf32, #tpu.memory_space<vmem>>, vector<1x32x128xf32>
    %cst = arith.constant dense<0.000000e+00> : vector<1x32xf32>
    %1 = vector.multi_reduction <add>, %0, %cst [2] : vector<1x32x128xf32> to vector<1x32xf32>
    %cst_2 = arith.constant 1.280000e+02 : f32
    %2 = vector.broadcast %cst_2 : f32 to vector<1x32xf32>
    %3 = arith.divf %1, %2 : vector<1x32xf32>
    %c0_3 = arith.constant 0 : index
    %c0_4 = arith.constant 0 : index
    %4 = vector.load %arg2[%c0_3, %c0_4] : memref<32x8xf32, #tpu.memory_space<vmem>>, vector<32x8xf32>
    %cst_5 = arith.constant dense<0.000000e+00> : vector<1x8xf32>
    %5 = tpu.matmul %3, %4, %cst_5 {dimension_numbers = #tpu.dot_dimension_numbers<[1], [0], [0], [1], [0, 0, 1, 1], [], []>} : vector<1x32xf32>, vector<32x8xf32>, vector<1x8xf32> -> vector<1x8xf32>
    %6 = arith.negf %5 : vector<1x8xf32>
    %7 = math.exp %6 : vector<1x8xf32>
    %cst_6 = arith.constant 1.000000e+00 : f32
    %8 = vector.broadcast %cst_6 : f32 to vector<1x8xf32>
    %9 = arith.addf %8, %7 : vector<1x8xf32>
    %10 = arith.divf %8, %9 : vector<1x8xf32>
    %11 = arith.mulf %5, %10 : vector<1x8xf32>
    %c0_7 = arith.constant 0 : index
    %c0_8 = arith.constant 0 : index
    %12 = vector.load %arg3[%c0_7, %c0_8] : memref<8x32xf32, #tpu.memory_space<vmem>>, vector<8x32xf32>
    %cst_9 = arith.constant dense<0.000000e+00> : vector<1x32xf32>
    %13 = tpu.matmul %11, %12, %cst_9 {dimension_numbers = #tpu.dot_dimension_numbers<[1], [0], [0], [1], [0, 0, 1, 1], [], []>} : vector<1x8xf32>, vector<8x32xf32>, vector<1x32xf32> -> vector<1x32xf32>
    %14 = arith.negf %13 : vector<1x32xf32>
    %15 = math.exp %14 : vector<1x32xf32>
    %cst_10 = arith.constant 1.000000e+00 : f32
    %16 = vector.broadcast %cst_10 : f32 to vector<1x32xf32>
    %17 = arith.addf %16, %15 : vector<1x32xf32>
    %18 = arith.divf %16, %17 : vector<1x32xf32>
    %c0_11 = arith.constant 0 : index
    %c0_12 = arith.constant 0 : index
    %c0_13 = arith.constant 0 : index
    %19 = vector.load %arg1[%c0_11, %c0_12, %c0_13] : memref<1x32x128xf32, #tpu.memory_space<vmem>>, vector<1x32x128xf32>
    %20 = vector.shape_cast %18 : vector<1x32xf32> to vector<1x32x1xf32>
    %21 = vector.broadcast %20 : vector<1x32x1xf32> to vector<1x32x128xf32>
    %22 = arith.mulf %19, %21 : vector<1x32x128xf32>
    %c0_14 = arith.constant 0 : index
    %c0_15 = arith.constant 0 : index
    %c0_16 = arith.constant 0 : index
    %23 = vector.load %arg4[%c0_14, %c0_15, %c0_16] : memref<1x32x128xf32, #tpu.memory_space<vmem>>, vector<1x32x128xf32>
    tpu.vector_store %arg4[%c0_14, %c0_15, %c0_16], %22 {strides = array<i32>} : memref<1x32x128xf32, #tpu.memory_space<vmem>>, vector<1x32x128xf32>,
    return
  }
  func.func @transform_0(%arg0: i32) -> (i32, i32, i32) {
    %c0_i32 = arith.constant 0 : i32
    %c0_i32_0 = arith.constant 0 : i32
    %c0_i32_1 = arith.constant 0 : i32
    return %arg0, %c0_i32, %c0_i32_0 : i32, i32, i32
  }
  func.func @transform_1(%arg0: i32) -> (i32, i32) {
    %c0_i32 = arith.constant 0 : i32
    %c0_i32_0 = arith.constant 0 : i32
    %c0_i32_1 = arith.constant 0 : i32
    return %c0_i32, %c0_i32_0 : i32, i32
  }
  func.func @transform_2(%arg0: i32) -> (i32, i32) {
    %c0_i32 = arith.constant 0 : i32
    %c0_i32_0 = arith.constant 0 : i32
    %c0_i32_1 = arith.constant 0 : i32
    return %c0_i32, %c0_i32_0 : i32, i32
  }
  func.func @transform_3(%arg0: i32) -> (i32, i32, i32) {
    %c0_i32 = arith.constant 0 : i32
    %c0_i32_0 = arith.constant 0 : i32
    %c0_i32_1 = arith.constant 0 : i32
    return %arg0, %c0_i32, %c0_i32_0 : i32, i32, i32
  }
}

</mosaic_0001>

<llo_original>
// kernel: tpu_custom_call.1
$region0: #{tpu_custom_call.1}
  #allocation0 [shape = 'u32[]', space=smem, size = 0x4, offset = 0x4, fixed_abs, tag = 'smem constant byte address 0x4 - core index']
  #allocation1 [shape = 'u32[144,128]{1,0:T(1,128)}', space=vmem, size = 0x12000, scoped, tag = 'internal scratch']
  %s0 = inlined_call_operand.hbm [shape: f32[2,32,128], index: 0, kind: input, shape index: {}]
  %s1 = inlined_call_operand.vmem [shape: f32[32,8], index: 1, kind: input, shape index: {}]
  %s2 = inlined_call_operand.vmem [shape: f32[8,32], index: 2, kind: input, shape index: {}]
  %s3 = inlined_call_operand.hbm [shape: f32[2,32,128], index: 3, kind: output, shape index: {}]
  %s4 = sld [smem:[#allocation0]]
  $region49: #{tpu_custom_call.1} parent=0
    _
  %s6 = ssub.s32 1, %s4
  %s7 = scalar_select 0, %s6, %s4
  $region1: #{tpu_custom_call.1} parent=0
    #allocation2 [shape = 'u8[32768]{0}', space=vmem, size = 0x8000, scoped, tag = 'input window, operand 0']
    #allocation3 [shape = 's32[2]{0}', space=sflag, size = 0x8, scoped, tag = 'scoped memory for tpu_custom_call.1']
    #allocation4 [shape = 's32[2]{0}', space=sflag, size = 0x8, scoped, tag = 'scoped memory for tpu_custom_call.1']
    #allocation5 [shape = 'u8[32768]{0}', space=vmem, size = 0x8000, scoped, tag = 'output window, operand 0']
    %8 = vsyncpa [#allocation3], 0
    %s9 = scalar_lea.sflag [#allocation3], 1
    %10 = vsyncpa %s9, 0
    %11 = vsyncpa [#allocation4], 0
    %s12 = scalar_lea.sflag [#allocation4], 1
    %13 = vsyncpa %s12, 0
    loop: start=0, step=1, limit=4
    $region2: #{tpu_custom_call.1} parent=1 // loop_pre_header
      _
    $region3: #{tpu_custom_call.1} parent=1 // loop_header
      %s15 = sphi 0, %s19
      %p16 = scmp.ge.s32.totalorder %s15, 4
      %s25 = sphi 0, %s27
      %s28 = sphi 0, %s25
      %s29 = sphi 0, %s28
      %s45 = sphi 0, %s29
      %s49 = sphi 0, %s49
      %s51 = sphi 0, %s49
      %s52 = sphi 0, %s51
      %s66 = sphi 0, %s52
      %s70 = sphi 0, %s70
      %s72 = sphi 0, %s70
      %s73 = sphi 0, %s72
      %s87 = sphi 0, %s73
      %s93 = sphi 0, %s95
      %s96 = sphi 0, %s93
      %s97 = sphi 0, %s96
      %s113 = sphi 0, %s97
    $region4: #{tpu_custom_call.1} parent=1 // loop_header_branch
      %18 = sbr.rel (%p16) target = $region8
    $region5: #{tpu_custom_call.1} parent=1 // loop_body
      %s20 = ssub.s32 %s15, 1
      %s21 = ssub.s32 %s15, 2
      %s22 = sadd.s32 %s15, 1
      %s23 = ssub.s32 %s15, %s22
      %p24 = scmp.eq.s32.totalorder %s23, 0
      %s26 = sadd.s32 %s25, 1
      %s27 = scalar_select %p24, %s25, %s26
      %p30 = pneg %p24
      %p31 = scmp.eq.s32.totalorder %s15, 1
      %p32 = por %p30, %p31
      %p33 = scmp.ne.s32.totalorder %s25, %s28
      %p34 = scmp.eq.s32.totalorder %s15, 0
      %p35 = por %p33, %p34
      %p36 = scmp.ne.s32.totalorder %s25, %s28
      %p37 = scmp.eq.s32.totalorder %s20, 1
      %p38 = por %p36, %p37
      %p39 = scmp.ne.s32.totalorder %s28, %s29
      %p40 = scmp.eq.s32.totalorder %s20, 0
      %p41 = por %p39, %p40
      %p42 = scmp.ne.s32.totalorder %s28, %s29
      %p43 = scmp.eq.s32.totalorder %s21, 1
      %p44 = por %p42, %p43
      %p46 = scmp.ne.s32.totalorder %s29, %s45
      %p47 = scmp.eq.s32.totalorder %s21, 0
      %p48 = por %p46, %p47
      %s50 = sadd.s32 %s49, 1
      %p53 = scmp.eq.s32.totalorder %s15, 1
      %p54 = scmp.ne.s32.totalorder %s49, %s51
      %p55 = scmp.eq.s32.totalorder %s15, 0
      %p56 = por %p54, %p55
      %p57 = scmp.ne.s32.totalorder %s49, %s51
      %p58 = scmp.eq.s32.totalorder %s20, 1
      %p59 = por %p57, %p58
      %p60 = scmp.ne.s32.totalorder %s51, %s52
      %p61 = scmp.eq.s32.totalorder %s20, 0
      %p62 = por %p60, %p61
      %p63 = scmp.ne.s32.totalorder %s51, %s52
      %p64 = scmp.eq.s32.totalorder %s21, 1
      %p65 = por %p63, %p64
      %p67 = scmp.ne.s32.totalorder %s52, %s66
      %p68 = scmp.eq.s32.totalorder %s21, 0
      %p69 = por %p67, %p68
      %s71 = sadd.s32 %s70, 1
      %p74 = scmp.eq.s32.totalorder %s15, 1
      %p75 = scmp.ne.s32.totalorder %s70, %s72
      %p76 = scmp.eq.s32.totalorder %s15, 0
      %p77 = por %p75, %p76
      %p78 = scmp.ne.s32.totalorder %s70, %s72
      %p79 = scmp.eq.s32.totalorder %s20, 1
      %p80 = por %p78, %p79
      %p81 = scmp.ne.s32.totalorder %s72, %s73
      %p82 = scmp.eq.s32.totalorder %s20, 0
      %p83 = por %p81, %p82
      %p84 = scmp.ne.s32.totalorder %s72, %s73
      %p85 = scmp.eq.s32.totalorder %s21, 1
      %p86 = por %p84, %p85
      %p88 = scmp.ne.s32.totalorder %s73, %s87
      %p89 = scmp.eq.s32.totalorder %s21, 0
      %p90 = por %p88, %p89
      %s91 = ssub.s32 %s15, %s22
      %p92 = scmp.eq.s32.totalorder %s91, 0
      %s94 = sadd.s32 %s93, 1
      %s95 = scalar_select %p92, %s93, %s94
      %p98 = pneg %p92
      %p99 = scmp.eq.s32.totalorder %s15, 1
      %p100 = por %p98, %p99
      %p101 = scmp.ne.s32.totalorder %s93, %s96
      %p102 = scmp.eq.s32.totalorder %s15, 0
      %p103 = por %p101, %p102
      %p104 = scmp.ne.s32.totalorder %s93, %s96
      %p105 = scmp.eq.s32.totalorder %s20, 1
      %p106 = por %p104, %p105
      %p107 = scmp.ne.s32.totalorder %s96, %s97
      %p108 = scmp.eq.s32.totalorder %s20, 0
      %p109 = por %p107, %p108
      %p110 = scmp.ne.s32.totalorder %s96, %s97
      %p111 = scmp.eq.s32.totalorder %s21, 1
      %p112 = por %p110, %p111
      %p114 = scmp.ne.s32.totalorder %s97, %s113
      %p115 = scmp.eq.s32.totalorder %s21, 0
      %p116 = por %p114, %p115
      %p117 = scmp.le.s32.totalorder 1, %s15
      %p118 = scmp.lt.s32.totalorder %s15, 3
      %p119 = pnand %p117, %p118
      %p120 = pneg %p119
      // Predicated region
      $region9: #{tpu_custom_call.1} parent=5 // pred_check
        _
      $region10: #{tpu_custom_call.1} parent=5 // pred_check_branch
        %122 = sbr.rel (%p119) target = $region12
      $region11: #{tpu_custom_call.1} parent=5 // pred_region
        %s123 = ssub.s32 %s15, 1
        // Predicated region
        $region13: #{tpu_custom_call.1} parent=11 // pred_check
          %p124 = pneg %p62
        $region14: #{tpu_custom_call.1} parent=11 // pred_check_branch
          %126 = sbr.rel (%p124) target = $region16
        $region15: #{tpu_custom_call.1} parent=11 // pred_region
          _
        $region16: #{tpu_custom_call.1} parent=11 // pred_fallthru
          _
        // Predicated region
        $region17: #{tpu_custom_call.1} parent=11 // pred_check
          %p127 = pneg %p83
        $region18: #{tpu_custom_call.1} parent=11 // pred_check_branch
          %129 = sbr.rel (%p127) target = $region20
        $region19: #{tpu_custom_call.1} parent=11 // pred_region
          _
        $region20: #{tpu_custom_call.1} parent=11 // pred_fallthru
          _
      $region12: #{tpu_custom_call.1} parent=5 // pred_fallthru
        _
      %p130 = scmp.lt.s32.totalorder %s15, 2
      // Predicated region
      $region21: #{tpu_custom_call.1} parent=5 // pred_check
        %p131 = pneg %p130
      $region22: #{tpu_custom_call.1} parent=5 // pred_check_branch
        %133 = sbr.rel (%p131) target = $region24
      $region23: #{tpu_custom_call.1} parent=5 // pred_region
        // Predicated region
        $region25: #{tpu_custom_call.1} parent=23 // pred_check
          %p134 = pneg %p35
        $region26: #{tpu_custom_call.1} parent=23 // pred_check_branch
          %136 = sbr.rel (%p134) target = $region28
        $region27: #{tpu_custom_call.1} parent=23 // pred_region
          %s137 = sand.u32 %s25, 1
          %s138 = scalar_lea.sflag [#allocation3], %s137
          %s139 = sand.u32 %s25, 1
          %s140 = smul.addr %s139, 32
          %s141 = scalar_lea.vmem [#allocation2], %s140
          %s143 = ssub.s32 512, 512
          %144 = vsyncadd %s138, %s143
          %s145 = smul.addr %s15, 4
          %s146 = smul.addr %s145, 128
          %s147 = scalar_lea.hbm %s0, %s146
          %s148 = sshll.u32 %s141, 4
          %s149 = int_to_ptr.vmem [resolvable:$true] %s148
          %154 = dma.hbm_to_vmem [thread:$0]  %s147, 512, %s149, %s138, 128, 128, 8
        $region28: #{tpu_custom_call.1} parent=23 // pred_fallthru
          _
      $region24: #{tpu_custom_call.1} parent=5 // pred_fallthru
        _
      %p155 = scmp.le.s32.totalorder 1, %s15
      %p156 = scmp.lt.s32.totalorder %s15, 3
      %p157 = pnand %p155, %p156
      %p158 = pneg %p157
      // Predicated region
      $region29: #{tpu_custom_call.1} parent=5 // pred_check
        _
      $region30: #{tpu_custom_call.1} parent=5 // pred_check_branch
        %160 = sbr.rel (%p157) target = $region32
      $region31: #{tpu_custom_call.1} parent=5 // pred_region
        %s161 = ssub.s32 %s15, 1
        %s162 = sand.u32 %s28, 1
        %s163 = scalar_lea.sflag [#allocation3], %s162
        %s164 = sand.u32 %s28, 1
        %s165 = smul.addr %s164, 32
        %s166 = scalar_lea.vmem [#allocation2], %s165
        // Predicated region
        $region33: #{tpu_custom_call.1} parent=31 // pred_check
          %p167 = pneg %p41
        $region34: #{tpu_custom_call.1} parent=31 // pred_check_branch
          %169 = sbr.rel (%p167) target = $region36
        $region35: #{tpu_custom_call.1} parent=31 // pred_region
          %170 = dma.done %s163, 512
        $region36: #{tpu_custom_call.1} parent=31 // pred_fallthru
          _
        %s171 = sand.u32 %s28, 1
        %s172 = scalar_lea.sflag [#allocation3], %s171
        %s173 = sand.u32 %s28, 1
        %s174 = smul.addr %s173, 32
        %s175 = scalar_lea.vmem [#allocation2], %s174
        %p176 = pneg %p41
        %p177 = pneg %p38
        %p178 = pneg %p62
        %p179 = pneg %p59
        %p180 = pneg %p83
        %p181 = pneg %p80
        %p182 = pneg %p109
        %p183 = pneg %p106
        %s184 = sand.u32 %s96, 1
        %s185 = scalar_lea.sflag [#allocation4], %s184
        %s186 = sand.u32 %s96, 1
        %s187 = smul.addr %s186, 32
        %s188 = scalar_lea.vmem [#allocation5], %s187
        %v189 = vld [vmem:[%s166] sm:$0xff]
        %v190 = vld [vmem:[%s166 + $0x8] sm:$0xff]
        %v191 = vld [vmem:[%s166 + $0x10] sm:$0xff]
        %v192 = vld [vmem:[%s166 + $0x18] sm:$0xff]
        %193 = vadd.xlane.f32.xlu0 %v189
        %v194 = vpop.xlane.xlu0 %193
        %195 = vadd.xlane.f32.xlu0 %v190
        %v196 = vpop.xlane.xlu0 %195
        %197 = vadd.xlane.f32.xlu0 %v191
        %v198 = vpop.xlane.xlu0 %197
        %199 = vadd.xlane.f32.xlu0 %v192
        %v200 = vpop.xlane.xlu0 %199
        %v201 = vrcp.pop 128.0
        %v202 = vmul.f32 %v194, %v201
        %v203 = vmul.f32 %v196, %v201
        %v204 = vmul.f32 %v198, %v201
        %v205 = vmul.f32 %v200, %v201
        %v206 = vld [vmem:[%s1] sm:$0xff]
        %v207 = vld [vmem:[%s1 + $0x8] sm:$0xff]
        %v208 = vld [vmem:[%s1 + $0x10] sm:$0xff]
        %v209 = vld [vmem:[%s1 + $0x18] sm:$0xff]
        %v214 = vlaneseq
        %v215 = vand.u32 %v214, 127
        %v216 = vlaneseq
        %v217 = vshrl.u32 %v216, 7
        %v218 = vsub.s32 %v215, %v217
        %v219 = vrot.slane %v202, %v218
        %v220 = vadd.s32 %v215, 4294967288
        %v221 = vlaneseq
        %v222 = vshrl.u32 %v221, 7
        %v223 = vsub.s32 %v220, %v222
        %v224 = vrot.slane %v203, %v223
        %vm225 = vcmask 130112
        %v226 = vsel %vm225, %v224, %v219
        %v227 = vadd.s32 %v215, 4294967280
        %v228 = vlaneseq
        %v229 = vshrl.u32 %v228, 7
        %v230 = vsub.s32 %v227, %v229
        %v231 = vrot.slane %v204, %v230
        %vm232 = vcmask 195712
        %v233 = vsel %vm232, %v231, %v226
        %v234 = vadd.s32 %v215, 4294967272
        %v235 = vlaneseq
        %v236 = vshrl.u32 %v235, 7
        %v237 = vsub.s32 %v234, %v236
        %v238 = vrot.slane %v205, %v237
        %vm239 = vcmask 261312
        %v240 = vsel %vm239, %v238, %v233
        %vm241 = vcmask 261120
        %v242 = vsel %vm241, %v240, 0
        %244 = vmatprep.subr.mxu0 0.0
        %245 = vmatpush1.msra.mxu0 0.0
        %246 = vmatprep.subr.mxu0 0.0
        %247 = vmatpush1.msra.mxu0 0.0
        %248 = vmatprep.subr.mxu0 0.0
        %249 = vmatpush1.msra.mxu0 0.0
        %250 = vmatprep.subr.mxu0 0.0
        %251 = vmatpush1.msra.mxu0 0.0
        %252 = vmatprep.subr.mxu0 0.0
        %253 = vmatpush1.msra.mxu0 0.0
        %254 = vmatprep.subr.mxu0 0.0
        %255 = vmatpush1.msra.mxu0 0.0
        %256 = vmatprep.subr.mxu0 0.0
        %257 = vmatpush1.msra.mxu0 0.0
        %258 = vmatprep.subr.mxu0 0.0
        %259 = vmatpush1.msra.mxu0 0.0
        %260 = vmatprep.subr.mxu0 0.0
        %261 = vmatpush1.msra.mxu0 0.0
        %262 = vmatprep.subr.mxu0 0.0
        %263 = vmatpush1.msra.mxu0 0.0
        %264 = vmatprep.subr.mxu0 0.0
        %265 = vmatpush1.msra.mxu0 0.0
        %266 = vmatprep.subr.mxu0 0.0
        %267 = vmatpush1.msra.mxu0 0.0
        %268 = vmatprep.subr.mxu0 0.0
        %269 = vmatpush1.msra.mxu0 %v209
        %270 = vmatprep.subr.mxu0 0.0
        %271 = vmatpush1.msra.mxu0 %v208
        %272 = vmatprep.subr.mxu0 0.0
        %273 = vmatpush1.msra.mxu0 %v207
        %274 = vmatprep.subr.mxu0 0.0
        %275 = vmatpush1.msra.mxu0 %v206
        %276 = vmatprep.subr.mxu0 0.0
        %277 = vmatpush2.msra.mxu0 0.0
        %278 = vmatprep.subr.mxu0 0.0
        %279 = vmatpush2.msra.mxu0 0.0
        %280 = vmatprep.subr.mxu0 0.0
        %281 = vmatpush2.msra.mxu0 0.0
        %282 = vmatprep.subr.mxu0 0.0
        %283 = vmatpush2.msra.mxu0 0.0
        %284 = vmatprep.subr.mxu0 0.0
        %285 = vmatpush2.msra.mxu0 0.0
        %286 = vmatprep.subr.mxu0 0.0
        %287 = vmatpush2.msra.mxu0 0.0
        %288 = vmatprep.subr.mxu0 0.0
        %289 = vmatpush2.msra.mxu0 0.0
        %290 = vmatprep.subr.mxu0 0.0
        %291 = vmatpush2.msra.mxu0 0.0
        %292 = vmatprep.subr.mxu0 0.0
        %293 = vmatpush2.msra.mxu0 0.0
        %294 = vmatprep.subr.mxu0 0.0
        %295 = vmatpush2.msra.mxu0 0.0
        %296 = vmatprep.subr.mxu0 0.0
        %297 = vmatpush2.msra.mxu0 0.0
        %298 = vmatprep.subr.mxu0 0.0
        %299 = vmatpush2.msra.mxu0 0.0
        %300 = vmatprep.subr.mxu0 0.0
        %301 = vmatpush2.msra.mxu0 0.0
        %302 = vmatprep.subr.mxu0 0.0
        %303 = vmatpush2.msra.mxu0 0.0
        %304 = vmatprep.subr.mxu0 0.0
        %305 = vmatpush2.msra.mxu0 0.0
        %306 = vmatprep.subr.mxu0 0.0
        %307 = vmatpush2.msra.mxu0 0.0
        %308 = vmatprep.mubr.f32.mxu0 0.0
        %309 = vmatmul.mubr.f32.gmra.mxu0 %v242
        %v310 = vpop.f32.mrf.mxu0
        %v311 = vadd.f32 0.0, %v310
        %v312 = vpop.f32.mrf.mxu0
        %313 = vdwg.mxu0
        %v314 = vxor.u32 %v311, 2147483648
        %v315 = vmul.f32 %v314, 1.442695
        %v316 = vpow.pop %v315
        %v317 = vadd.f32 %v316, 1.0
        %v318 = vrcp.pop %v317
        %v319 = vmul.f32 1.0, %v318
        %v320 = vmul.f32 %v311, %v319
        %v321 = vld [vmem:[%s2] sm:$0xff]
        %vm322 = vcmask 64512
        %v324 = vsel %vm322, %v320, 0
        %326 = vmatprep.subr.mxu0 0.0
        %327 = vmatpush1.msra.mxu0 0.0
        %328 = vmatprep.subr.mxu0 0.0
        %329 = vmatpush1.msra.mxu0 0.0
        %330 = vmatprep.subr.mxu0 0.0
        %331 = vmatpush1.msra.mxu0 0.0
        %332 = vmatprep.subr.mxu0 0.0
        %333 = vmatpush1.msra.mxu0 0.0
        %334 = vmatprep.subr.mxu0 0.0
        %335 = vmatpush1.msra.mxu0 0.0
        %336 = vmatprep.subr.mxu0 0.0
        %337 = vmatpush1.msra.mxu0 0.0
        %338 = vmatprep.subr.mxu0 0.0
        %339 = vmatpush1.msra.mxu0 0.0
        %340 = vmatprep.subr.mxu0 0.0
        %341 = vmatpush1.msra.mxu0 0.0
        %342 = vmatprep.subr.mxu0 0.0
        %343 = vmatpush1.msra.mxu0 0.0
        %344 = vmatprep.subr.mxu0 0.0
        %345 = vmatpush1.msra.mxu0 0.0
        %346 = vmatprep.subr.mxu0 0.0
        %347 = vmatpush1.msra.mxu0 0.0
        %348 = vmatprep.subr.mxu0 0.0
        %349 = vmatpush1.msra.mxu0 0.0
        %350 = vmatprep.subr.mxu0 0.0
        %351 = vmatpush1.msra.mxu0 0.0
        %352 = vmatprep.subr.mxu0 0.0
        %353 = vmatpush1.msra.mxu0 0.0
        %354 = vmatprep.subr.mxu0 0.0
        %355 = vmatpush1.msra.mxu0 0.0
        %356 = vmatprep.subr.mxu0 0.0
        %357 = vmatpush1.msra.mxu0 %v321
        %358 = vmatprep.subr.mxu0 0.0
        %359 = vmatpush2.msra.mxu0 0.0
        %360 = vmatprep.subr.mxu0 0.0
        %361 = vmatpush2.msra.mxu0 0.0
        %362 = vmatprep.subr.mxu0 0.0
        %363 = vmatpush2.msra.mxu0 0.0
        %364 = vmatprep.subr.mxu0 0.0
        %365 = vmatpush2.msra.mxu0 0.0
        %366 = vmatprep.subr.mxu0 0.0
        %367 = vmatpush2.msra.mxu0 0.0
        %368 = vmatprep.subr.mxu0 0.0
        %369 = vmatpush2.msra.mxu0 0.0
        %370 = vmatprep.subr.mxu0 0.0
        %371 = vmatpush2.msra.mxu0 0.0
        %372 = vmatprep.subr.mxu0 0.0
        %373 = vmatpush2.msra.mxu0 0.0
        %374 = vmatprep.subr.mxu0 0.0
        %375 = vmatpush2.msra.mxu0 0.0
        %376 = vmatprep.subr.mxu0 0.0
        %377 = vmatpush2.msra.mxu0 0.0
        %378 = vmatprep.subr.mxu0 0.0
        %379 = vmatpush2.msra.mxu0 0.0
        %380 = vmatprep.subr.mxu0 0.0
        %381 = vmatpush2.msra.mxu0 0.0
        %382 = vmatprep.subr.mxu0 0.0
        %383 = vmatpush2.msra.mxu0 0.0
        %384 = vmatprep.subr.mxu0 0.0
        %385 = vmatpush2.msra.mxu0 0.0
        %386 = vmatprep.subr.mxu0 0.0
        %387 = vmatpush2.msra.mxu0 0.0
        %388 = vmatprep.subr.mxu0 0.0
        %389 = vmatpush2.msra.mxu0 0.0
        %390 = vmatprep.mubr.f32.mxu0 0.0
        %391 = vmatmul.mubr.f32.gmra.mxu0 %v324
        %v392 = vpop.f32.mrf.mxu0
        %v393 = vadd.f32 0.0, %v392
        %v394 = vpop.f32.mrf.mxu0
        %395 = vdwg.mxu0
        %v396 = vxor.u32 %v393, 2147483648
        %v397 = vmul.f32 %v396, 1.442695
        %v398 = vpow.pop %v397
        %v399 = vadd.f32 %v398, 1.0
        %v400 = vrcp.pop %v399
        %v401 = vmul.f32 1.0, %v400
        %v402 = vlaneseq
        %v403 = vshrl.u32 %v402, 7
        %v404 = vsub.s32 0, %v403
        %v405 = vrot.slane %v401, %v404
        %407 = vbcast.lane.b32.xlu0 %v405, 256
        %v408 = vpop.permute.xlu0 %407
        %s410 = sor.u32 256, 8
        %411 = vbcast.lane.b32.xlu0 %v405, %s410
        %v412 = vpop.permute.xlu0 %411
        %s414 = sor.u32 256, 16
        %415 = vbcast.lane.b32.xlu0 %v405, %s414
        %v416 = vpop.permute.xlu0 %415
        %s418 = sor.u32 256, 24
        %419 = vbcast.lane.b32.xlu0 %v405, %s418
        %v420 = vpop.permute.xlu0 %419
        %v421 = vmul.f32 %v189, %v408
        %v422 = vmul.f32 %v190, %v412
        %v423 = vmul.f32 %v191, %v416
        %v424 = vmul.f32 %v192, %v420
        %425 = vst [vmem:[%s188] sm:$0xff] %v421
        %426 = vst [vmem:[%s188 + $0x8] sm:$0xff] %v422
        %427 = vst [vmem:[%s188 + $0x10] sm:$0xff] %v423
        %428 = vst [vmem:[%s188 + $0x18] sm:$0xff] %v424
        %s429 = sand.u32 %s96, 1
        %s430 = scalar_lea.sflag [#allocation4], %s429
        %s431 = sand.u32 %s96, 1
        %s432 = smul.addr %s431, 32
        %s433 = scalar_lea.vmem [#allocation5], %s432
        // Predicated region
        $region37: #{tpu_custom_call.1} parent=31 // pred_check
          %p434 = pneg %p106
        $region38: #{tpu_custom_call.1} parent=31 // pred_check_branch
          %436 = sbr.rel (%p434) target = $region40
        $region39: #{tpu_custom_call.1} parent=31 // pred_region
          %s438 = ssub.s32 512, 512
          %439 = vsyncadd %s430, %s438
          %s440 = smul.addr %s20, 4
          %s441 = smul.addr %s440, 128
          %s442 = scalar_lea.hbm %s3, %s441
          %s443 = sshll.u32 %s433, 4
          %s444 = int_to_ptr.vmem [resolvable:$true] %s443
          %449 = dma.vmem_to_hbm [thread:$0]  %s444, 512, %s442, %s430, 128, 128, 8
        $region40: #{tpu_custom_call.1} parent=31 // pred_fallthru
          _
      $region32: #{tpu_custom_call.1} parent=5 // pred_fallthru
        _
      %p450 = scmp.le.s32.totalorder 2, %s15
      // Predicated region
      $region41: #{tpu_custom_call.1} parent=5 // pred_check
        %p451 = pneg %p450
      $region42: #{tpu_custom_call.1} parent=5 // pred_check_branch
        %453 = sbr.rel (%p451) target = $region44
      $region43: #{tpu_custom_call.1} parent=5 // pred_region
        %s454 = ssub.s32 %s15, 2
        // Predicated region
        $region45: #{tpu_custom_call.1} parent=43 // pred_check
          %p455 = pneg %p112
        $region46: #{tpu_custom_call.1} parent=43 // pred_check_branch
          %457 = sbr.rel (%p455) target = $region48
        $region47: #{tpu_custom_call.1} parent=43 // pred_region
          %s458 = sand.u32 %s97, 1
          %s459 = scalar_lea.sflag [#allocation4], %s458
          %s460 = sand.u32 %s97, 1
          %s461 = smul.addr %s460, 32
          %s462 = scalar_lea.vmem [#allocation5], %s461
          %463 = dma.done %s459, 512
        $region48: #{tpu_custom_call.1} parent=43 // pred_fallthru
          _
      $region44: #{tpu_custom_call.1} parent=5 // pred_fallthru
        _
    $region6: #{tpu_custom_call.1} parent=1 // loop_footer
      %s19 = sadd.s32 1, %s15
    $region7: #{tpu_custom_call.1} parent=1 // loop_footer_branch
      %14 = sbr.rel target = $region3
    $region8: #{tpu_custom_call.1} parent=1 // loop_exit
      _
    %464 = vsyncpa [#allocation3], 1
    %s465 = scalar_lea.sflag [#allocation3], 1
    %466 = vsyncpa %s465, 1
    %467 = vsyncpa [#allocation4], 1
    %s468 = scalar_lea.sflag [#allocation4], 1
    %469 = vsyncpa %s468, 1

</llo_original>
